<compile_context>
chip_gen: v5e
topology: v5e:2x2
jax: 0.10.0
libtpu: 0.0.40
codegen_flags: <defaults>
</compile_context>

<pallas_src>
import functools

import jax
import jax.numpy as jnp
from jax import lax
from jax.experimental import pallas as pl
from jax.experimental.pallas import tpu as pltpu


def _round_up(x, m):
    return (x + m - 1) // m * m


def _vmem_capacity_bytes():
    try:
        return int(pltpu.get_tpu_info().vmem_capacity_bytes)
    except Exception:
        return 64 * 1024 * 1024          # conservative fallback: v7x per-TC VMEM


def _fused_recurrent_conv_kernel(xs_ref, wff_ref, bff_ref, wrec_ref, brec_ref,
                                 mask_ref, o_ref, apad_ref, fwd_ref,
                                 *, H, W, timesteps):
    """Feed-forward conv + `timesteps` recurrent convs for ONE image.

    xs_ref  : (1, Cip, NPIN)  zero-padded input, flattened spatial on lanes
    wff_ref : (3*Cop, 3*Cip)  feed-forward weights, [kh*Cop+co, kw*Cip+ci]
    bff_ref : (Cop, 1)        feed-forward bias (f32)
    wrec_ref: (3*Cop, 3*Cop)  recurrent weights, same folding
    brec_ref: (Cop, 1)        recurrent bias (f32)
    mask_ref: (Cop, HWp) f32  1.0 at real pixels, 0.0 at the 2 junk cols/row
    o_ref   : (1, Cop, HWp)   lane-dense interior band (wrapper crops junk)
    apad_ref: (Cop, NPOUT)    scratch: padded running activation slab
    fwd_ref : (Cop, HWp) f32  scratch: masked (out_forward + b_rec) residual
    """
    Wp = W + 2
    HWp = H * Wp
    store_off = Wp + 1                 # lane of interior pixel (0, 0) in the slab
    Cop = apad_ref.shape[0]
    NPOUT = apad_ref.shape[1]

    def shift_lanes(x, k):
        # S[:, l] = x[:, l + k]  (circular roll; wraparound lanes are never used)
        if k == 0:
            return x
        return pltpu.roll(x, shift=x.shape[-1] - k, axis=1)

    def conv3x3(slab, w_ref):
        # slab: (C, NP) zero-padded activation, pixel (ph, pw) at lane ph*Wp+pw.
        # One matmul; kw via input lane-rolls, kh via output lane-rolls (XLU).
        stacked = jnp.concatenate(
            [shift_lanes(slab, kw) for kw in range(3)], axis=0)       # (3*C, NP)
        parts = jnp.dot(w_ref[...], stacked,
                        preferred_element_type=jnp.float32)           # (3*Cop, NP)
        acc = parts[:Cop]
        acc = acc + shift_lanes(parts[Cop:2 * Cop], Wp)
        acc = acc + shift_lanes(parts[2 * Cop:], 2 * Wp)
        return acc[:, :HWp]                                           # (Cop, HWp) f32

    # ---- re-zero only the halo margins (scratch persists across grid steps);
    # ---- the interior [store_off, store_off+HWp) is fully overwritten below.
    interior_end = store_off + HWp
    zlo = min(_round_up(store_off, 128), NPOUT)    # covers [0, store_off)
    zhi = (interior_end // 128) * 128              # covers [interior_end, NPOUT)
    if zlo <= interior_end and store_off <= zhi:
        apad_ref[:, :zlo] = jnp.zeros((Cop, zlo), apad_ref.dtype)
        if zhi < NPOUT:
            apad_ref[:, zhi:] = jnp.zeros((Cop, NPOUT - zhi), apad_ref.dtype)
    else:                                          # degenerate tiny image
        apad_ref[...] = jnp.zeros_like(apad_ref)

    mask = mask_ref[...]                           # (Cop, HWp) 0/1 f32, loaded once

    # ---- feed-forward conv: out_forward = conv_ff(x) + b_ff ----
    ff = conv3x3(xs_ref[0], wff_ref) + bff_ref[...]
    out0 = ff * mask                               # masked out_forward (f32)
    fwd_ref[...] = out0 + brec_ref[...] * mask     # residual with b_rec folded in
    apad_ref[:, store_off:interior_end] = out0.astype(apad_ref.dtype)

    # ---- recurrence: out <- conv_rec(out) + b_rec + out_forward ----
    def step(_, band):
        r = conv3x3(apad_ref[...], wrec_ref) * mask + fwd_ref[...]
        apad_ref[:, store_off:interior_end] = r.astype(apad_ref.dtype)
        return r

    # unroll=True is right for small timesteps/Cop; for large configs prefer a
    # rolled / lightly-unrolled loop to keep vreg live ranges bounded.
    band = lax.fori_loop(0, timesteps, step, out0, unroll=True)

    # Lane-dense interior band; the wrapper crops the 2 junk columns per row.
    o_ref[0] = band.astype(o_ref.dtype)


def fused_recurrent_conv2d(x_nchw, ff_w, ff_b, rec_w, rec_b, *,
                           timesteps, compute_dtype=None):
    """RecurrentConv2d.forward for kernel_size=3, stride=1, padding=1.

    x_nchw: (N, Cin, H, W); ff_w/rec_w in HWIO layout (3, 3, Cin/Cout, Cout).
    compute_dtype: MXU operand dtype (default: x dtype). Use jnp.bfloat16 on
    v6e/v7x; keep f32 on v5e. Accumulation / residual always stay f32.
    Returns (N, Cout, H, W).
    """
    N, Cin, H, W = x_nchw.shape
    KH, KW, _, Cout = ff_w.shape
    assert (KH, KW) == (3, 3), "kernel implements the default 3x3/s1/p1 conv"

    out_dtype = x_nchw.dtype
    if compute_dtype is None:
        compute_dtype = out_dtype
    compute_dtype = jnp.dtype(compute_dtype)

    Wp = W + 2
    HWp = H * Wp
    Cip = _round_up(Cin, 8)
    Cop = _round_up(Cout, 8)
    np_min = (H + 2) * Wp + 2          # +2 slack lanes, read only into masked junk
    NPIN = _round_up(np_min, 128)
    NPOUT = _round_up(np_min, 128)
    c_item = compute_dtype.itemsize
    o_item = jnp.dtype(out_dtype).itemsize

    # ---- generation-aware VMEM policy (128 MiB v5e/v6e, 64 MiB v7x) ----
    vmem_cap = _vmem_capacity_bytes()
    est = (2 * Cip * NPIN * c_item                         # input block (dbl-buffered)
           + 2 * Cop * HWp * o_item                        # output block
           + 2 * (9 * Cop * Cip + 9 * Cop * Cop) * c_item  # folded weights
           + 2 * (2 * Cop * 4 + Cop * HWp * 4)             # biases + valid mask (f32)
           + Cop * NPOUT * c_item + Cop * HWp * 4)         # scratch slabs
    budget = int(0.80 * vmem_cap)
    if est > budget:
        # TODO(synk): tile H into row blocks with a 1-row halo exchanged across
        # timesteps for images that do not stay fully VMEM-resident.
        raise ValueError(
            f"activation (~{est / 2**20:.1f} MiB) exceeds the VMEM budget "
            f"(~{budget / 2**20:.1f} MiB on this TPU generation); "
            "spatial row-tiling is not implemented")
    vmem_limit = int(min(int(0.85 * vmem_cap), max(32 * 1024 * 1024, 4 * est)))

    # ---- one-time input prep (pads/reshapes only, no transposes) ----
    xs = jnp.pad(x_nchw, ((0, 0), (0, Cip - Cin), (1, 1), (1, 1)))
    xs = xs.reshape(N, Cip, (H + 2) * Wp)
    xs = jnp.pad(xs, ((0, 0), (0, 0), (0, NPIN - (H + 2) * Wp))).astype(compute_dtype)

    def fold(w_hwio, c_real, C):
        # HWIO -> (3*Cop, 3*C) with [kh*Cop + co, kw*C + ci] = w[kh, kw, ci, co]
        w = jnp.pad(w_hwio, ((0, 0), (0, 0), (0, C - c_real), (0, Cop - Cout)))
        return jnp.transpose(w, (0, 3, 1, 2)).reshape(3 * Cop, 3 * C).astype(compute_dtype)

    wff = fold(ff_w, Cin, Cip)
    wrec = fold(rec_w, Cout, Cop)
    bff = jnp.pad(ff_b, (0, Cop - Cout)).reshape(Cop, 1).astype(jnp.float32)
    brec = jnp.pad(rec_b, (0, Cop - Cout)).reshape(Cop, 1).astype(jnp.float32)

    # valid-lane mask: band lane l = h*Wp + w' is a real pixel iff w' < W.
    col = jnp.arange(HWp, dtype=jnp.int32) % Wp
    mask = jnp.broadcast_to((col < W).astype(jnp.float32)[None, :], (Cop, HWp))

    kernel = functools.partial(_fused_recurrent_conv_kernel,
                               H=H, W=W, timesteps=timesteps)

    # TODO(synk): at realistic channel counts, mark the weight/bias/mask specs
    # pipeline_mode=pl.Buffered(1) (constant index_map => single buffer) and
    # batch several images per grid step when N >> number of TensorCores.
    out = pl.pallas_call(
        kernel,
        out_shape=jax.ShapeDtypeStruct((N, Cop, HWp), out_dtype),
        grid=(N,),
        in_specs=[
            pl.BlockSpec((1, Cip, NPIN), lambda b: (b, 0, 0)),
            pl.BlockSpec((3 * Cop, 3 * Cip), lambda b: (0, 0)),
            pl.BlockSpec((Cop, 1), lambda b: (0, 0)),
            pl.BlockSpec((3 * Cop, 3 * Cop), lambda b: (0, 0)),
            pl.BlockSpec((Cop, 1), lambda b: (0, 0)),
            pl.BlockSpec((Cop, HWp), lambda b: (0, 0)),
        ],
        out_specs=pl.BlockSpec((1, Cop, HWp), lambda b: (b, 0, 0)),
        scratch_shapes=[
            pltpu.VMEM((Cop, NPOUT), compute_dtype),   # padded running activation
            pltpu.VMEM((Cop, HWp), jnp.float32),       # out_forward + b_rec residual
        ],
        compiler_params=pltpu.CompilerParams(
            dimension_semantics=("parallel",),
            vmem_limit_bytes=vmem_limit),
    )(xs, wff, bff, wrec, brec, mask)

    # Crop padded channels and the 2 zero junk columns per row (fused by XLA).
    return out[:, :Cout, :].reshape(N, Cout, H, Wp)[..., :W]


def init_params(key, in_channels, out_channels, kernel_size=3):
    """Deterministic synthetic parameters (HWIO conv weights + biases)."""
    k_ff, k_ffb, k_rec, k_recb = jax.random.split(key, 4)
    ff_w = 0.1 * jax.random.normal(
        k_ff, (kernel_size, kernel_size, in_channels, out_channels), jnp.float32)
    ff_b = 0.1 * jax.random.normal(k_ffb, (out_channels,), jnp.float32)
    rec_w = 0.1 * jax.random.normal(
        k_rec, (kernel_size, kernel_size, out_channels, out_channels), jnp.float32)
    rec_b = 0.1 * jax.random.normal(k_recb, (out_channels,), jnp.float32)
    return {"ff_w": ff_w, "ff_b": ff_b, "rec_w": rec_w, "rec_b": rec_b}


@functools.partial(jax.jit, static_argnames=("timesteps",))
def recurrent_conv2d_forward(x_nchw, params, timesteps=2):
    """Matches RecurrentConv2d.forward (kernel_size=3, stride=1, padding=1)."""
    return fused_recurrent_conv2d(x_nchw, params["ff_w"], params["ff_b"],
                                  params["rec_w"], params["rec_b"],
                                  timesteps=timesteps)


def _reference_forward(x_nchw, params, timesteps=2):
    """Pure-JAX reference using lax.conv_general_dilated (NHWC / HWIO)."""
    x = jnp.transpose(x_nchw, (0, 2, 3, 1))
    dn = ("NHWC", "HWIO", "NHWC")

    def conv(inp, w, b):
        y = jax.lax.conv_general_dilated(inp, w, (1, 1), ((1, 1), (1, 1)),
                                         dimension_numbers=dn)
        return y + b[None, None, None, :]

    out_fwd = conv(x, params["ff_w"], params["ff_b"])
    out = out_fwd
    for _ in range(timesteps):
        out = conv(out, params["rec_w"], params["rec_b"]) + out_fwd
    return jnp.transpose(out, (0, 3, 1, 2))


if __name__ == "__main__":
    key = jax.random.PRNGKey(0)
    k_x, k_p = jax.random.split(key)

    batch, in_channels, out_channels, spatial = 2, 4, 8, 16
    timesteps = 2

    x = jax.random.normal(k_x, (batch, in_channels, spatial, spatial), jnp.float32)
    params = init_params(k_p, in_channels, out_channels)

    out = recurrent_conv2d_forward(x, params, timesteps=timesteps)
    out = jax.block_until_ready(out)

    assert out.shape == (batch, out_channels, spatial, spatial), out.shape

    ref = _reference_forward(x, params, timesteps=timesteps)
    assert jnp.allclose(out, ref, rtol=1e-3, atol=1e-3), (
        float(jnp.max(jnp.abs(out - ref))))

    print("KERNEL_OK")
</pallas_src>

<mosaic_0001>
module attributes {stable_mosaic.version = 11 : i64} {
  func.func @_fused_recurrent_conv_kernel(%arg0: i32, %arg1: memref<1x8x384xf32, #tpu.memory_space<vmem>>, %arg2: memref<24x24xf32, #tpu.memory_space<vmem>>, %arg3: memref<8x1xf32, #tpu.memory_space<vmem>>, %arg4: memref<24x24xf32, #tpu.memory_space<vmem>>, %arg5: memref<8x1xf32, #tpu.memory_space<vmem>>, %arg6: memref<8x288xf32, #tpu.memory_space<vmem>>, %arg7: memref<1x8x288xf32, #tpu.memory_space<vmem>>, %arg8: memref<8x384xf32, #tpu.memory_space<vmem>>, %arg9: memref<8x288xf32, #tpu.memory_space<vmem>>) attributes {dimension_semantics = [#tpu.dimension_semantics<parallel>], iteration_bounds = array<i64: 2>, scalar_prefetch = 0 : i64, scratch_operands = 2 : i64, tpu.core_type = #tpu.core_type<tc>, window_params = [{transform_indices = @transform_0, window_bounds = array<i64: 1, 8, 384>}, {pipeline_mode = #tpu.pipeline_mode<synchronous>, transform_indices = @transform_1, window_bounds = array<i64: 24, 24>}, {pipeline_mode = #tpu.pipeline_mode<synchronous>, transform_indices = @transform_2, window_bounds = array<i64: 8, 1>}, {pipeline_mode = #tpu.pipeline_mode<synchronous>, transform_indices = @transform_3, window_bounds = array<i64: 24, 24>}, {pipeline_mode = #tpu.pipeline_mode<synchronous>, transform_indices = @transform_4, window_bounds = array<i64: 8, 1>}, {pipeline_mode = #tpu.pipeline_mode<synchronous>, transform_indices = @transform_5, window_bounds = array<i64: 8, 288>}, {transform_indices = @transform_6, window_bounds = array<i64: 1, 8, 288>}]} {
    %cst = arith.constant 0.000000e+00 : f32
    %0 = vector.broadcast %cst : f32 to vector<8x128xf32>
    %c0 = arith.constant 0 : index
    %c0_0 = arith.constant 0 : index
    %1 = vector.load %arg8[%c0, %c0_0] : memref<8x384xf32, #tpu.memory_space<vmem>>, vector<8x128xf32>
    tpu.vector_store %arg8[%c0, %c0_0], %0 {strides = array<i32>} : memref<8x384xf32, #tpu.memory_space<vmem>>, vector<8x128xf32>,
    %cst_1 = arith.constant 0.000000e+00 : f32
    %2 = vector.broadcast %cst_1 : f32 to vector<8x128xf32>
    %c0_2 = arith.constant 0 : index
    %c256 = arith.constant 256 : index
    %3 = vector.load %arg8[%c0_2, %c256] : memref<8x384xf32, #tpu.memory_space<vmem>>, vector<8x128xf32>
    tpu.vector_store %arg8[%c0_2, %c256], %2 {strides = array<i32>} : memref<8x384xf32, #tpu.memory_space<vmem>>, vector<8x128xf32>,
    %c0_3 = arith.constant 0 : index
    %c0_4 = arith.constant 0 : index
    %4 = vector.load %arg6[%c0_3, %c0_4] : memref<8x288xf32, #tpu.memory_space<vmem>>, vector<8x288xf32>
    %c0_5 = arith.constant 0 : index
    %c0_6 = arith.constant 0 : index
    %c0_7 = arith.constant 0 : index
    %5 = vector.load %arg1[%c0_5, %c0_6, %c0_7] : memref<1x8x384xf32, #tpu.memory_space<vmem>>, vector<1x8x384xf32>
    %6 = vector.shape_cast %5 : vector<1x8x384xf32> to vector<8x384xf32>
    %c383_i32 = arith.constant 383 : i32
    %7 = tpu.dynamic_rotate %6 by %c383_i32 dim 1 : vector<8x384xf32>, i32 -> vector<8x384xf32>
    %c382_i32 = arith.constant 382 : i32
    %8 = tpu.dynamic_rotate %6 by %c382_i32 dim 1 : vector<8x384xf32>, i32 -> vector<8x384xf32>
    %9 = tpu.concatenate %6, %7, %8 in 0 : vector<8x384xf32>, vector<8x384xf32>, vector<8x384xf32> -> vector<24x384xf32>
    %c0_8 = arith.constant 0 : index
    %c0_9 = arith.constant 0 : index
    %10 = vector.load %arg2[%c0_8, %c0_9] : memref<24x24xf32, #tpu.memory_space<vmem>>, vector<24x24xf32>
    %cst_10 = arith.constant dense<0.000000e+00> : vector<24x384xf32>
    %11 = tpu.matmul %10, %9, %cst_10 {dimension_numbers = #tpu.dot_dimension_numbers<[1], [0], [0], [1], [0, 0, 1, 1], [], []>} : vector<24x24xf32>, vector<24x384xf32>, vector<24x384xf32> -> vector<24x384xf32>
    %12 = vector.extract_strided_slice %11 {offsets = [0, 0], sizes = [8, 384], strides = [1, 1]} : vector<24x384xf32> to vector<8x384xf32>
    %13 = vector.extract_strided_slice %11 {offsets = [8, 0], sizes = [8, 384], strides = [1, 1]} : vector<24x384xf32> to vector<8x384xf32>
    %c366_i32 = arith.constant 366 : i32
    %14 = tpu.dynamic_rotate %13 by %c366_i32 dim 1 : vector<8x384xf32>, i32 -> vector<8x384xf32>
    %15 = arith.addf %12, %14 : vector<8x384xf32>
    %16 = vector.extract_strided_slice %11 {offsets = [16, 0], sizes = [8, 384], strides = [1, 1]} : vector<24x384xf32> to vector<8x384xf32>
    %c348_i32 = arith.constant 348 : i32
    %17 = tpu.dynamic_rotate %16 by %c348_i32 dim 1 : vector<8x384xf32>, i32 -> vector<8x384xf32>
    %18 = arith.addf %15, %17 : vector<8x384xf32>
    %19 = vector.extract_strided_slice %18 {offsets = [0, 0], sizes = [8, 288], strides = [1, 1]} : vector<8x384xf32> to vector<8x288xf32>
    %c0_11 = arith.constant 0 : index
    %c0_12 = arith.constant 0 : index
    %20 = vector.load %arg3[%c0_11, %c0_12] : memref<8x1xf32, #tpu.memory_space<vmem>>, vector<8x1xf32>
    %21 = vector.broadcast %20 : vector<8x1xf32> to vector<8x288xf32>
    %22 = arith.addf %19, %21 : vector<8x288xf32>
    %23 = arith.mulf %22, %4 : vector<8x288xf32>
    %c0_13 = arith.constant 0 : index
    %c0_14 = arith.constant 0 : index
    %24 = vector.load %arg5[%c0_13, %c0_14] : memref<8x1xf32, #tpu.memory_space<vmem>>, vector<8x1xf32>
    %25 = vector.broadcast %24 : vector<8x1xf32> to vector<8x288xf32>
    %26 = arith.mulf %25, %4 : vector<8x288xf32>
    %27 = arith.addf %23, %26 : vector<8x288xf32>
    %c0_15 = arith.constant 0 : index
    %c0_16 = arith.constant 0 : index
    %28 = vector.load %arg9[%c0_15, %c0_16] : memref<8x288xf32, #tpu.memory_space<vmem>>, vector<8x288xf32>
    tpu.vector_store %arg9[%c0_15, %c0_16], %27 {strides = array<i32>} : memref<8x288xf32, #tpu.memory_space<vmem>>, vector<8x288xf32>,
    %c0_17 = arith.constant 0 : index
    %c19 = arith.constant 19 : index
    %29 = vector.load %arg8[%c0_17, %c19] : memref<8x384xf32, #tpu.memory_space<vmem>>, vector<8x288xf32>
    tpu.vector_store %arg8[%c0_17, %c19], %23 {strides = array<i32>} : memref<8x384xf32, #tpu.memory_space<vmem>>, vector<8x288xf32>,
    %c0_i32 = arith.constant 0 : i32
    %c0_18 = arith.constant 0 : index
    %c0_19 = arith.constant 0 : index
    %30 = vector.load %arg8[%c0_18, %c0_19] : memref<8x384xf32, #tpu.memory_space<vmem>>, vector<8x384xf32>
    %c383_i32_20 = arith.constant 383 : i32
    %31 = tpu.dynamic_rotate %30 by %c383_i32_20 dim 1 : vector<8x384xf32>, i32 -> vector<8x384xf32>
    %c382_i32_21 = arith.constant 382 : i32
    %32 = tpu.dynamic_rotate %30 by %c382_i32_21 dim 1 : vector<8x384xf32>, i32 -> vector<8x384xf32>
    %33 = tpu.concatenate %30, %31, %32 in 0 : vector<8x384xf32>, vector<8x384xf32>, vector<8x384xf32> -> vector<24x384xf32>
    %c0_22 = arith.constant 0 : index
    %c0_23 = arith.constant 0 : index
    %34 = vector.load %arg4[%c0_22, %c0_23] : memref<24x24xf32, #tpu.memory_space<vmem>>, vector<24x24xf32>
    %cst_24 = arith.constant dense<0.000000e+00> : vector<24x384xf32>
    %35 = tpu.matmul %34, %33, %cst_24 {dimension_numbers = #tpu.dot_dimension_numbers<[1], [0], [0], [1], [0, 0, 1, 1], [], []>} : vector<24x24xf32>, vector<24x384xf32>, vector<24x384xf32> -> vector<24x384xf32>
    %36 = vector.extract_strided_slice %35 {offsets = [0, 0], sizes = [8, 384], strides = [1, 1]} : vector<24x384xf32> to vector<8x384xf32>
    %37 = vector.extract_strided_slice %35 {offsets = [8, 0], sizes = [8, 384], strides = [1, 1]} : vector<24x384xf32> to vector<8x384xf32>
    %c366_i32_25 = arith.constant 366 : i32
    %38 = tpu.dynamic_rotate %37 by %c366_i32_25 dim 1 : vector<8x384xf32>, i32 -> vector<8x384xf32>
    %39 = arith.addf %36, %38 : vector<8x384xf32>
    %40 = vector.extract_strided_slice %35 {offsets = [16, 0], sizes = [8, 384], strides = [1, 1]} : vector<24x384xf32> to vector<8x384xf32>
    %c348_i32_26 = arith.constant 348 : i32
    %41 = tpu.dynamic_rotate %40 by %c348_i32_26 dim 1 : vector<8x384xf32>, i32 -> vector<8x384xf32>
    %42 = arith.addf %39, %41 : vector<8x384xf32>
    %43 = vector.extract_strided_slice %42 {offsets = [0, 0], sizes = [8, 288], strides = [1, 1]} : vector<8x384xf32> to vector<8x288xf32>
    %44 = arith.mulf %43, %4 : vector<8x288xf32>
    %c0_27 = arith.constant 0 : index
    %c0_28 = arith.constant 0 : index
    %45 = vector.load %arg9[%c0_27, %c0_28] : memref<8x288xf32, #tpu.memory_space<vmem>>, vector<8x288xf32>
    %46 = arith.addf %44, %45 : vector<8x288xf32>
    %c0_29 = arith.constant 0 : index
    %c19_30 = arith.constant 19 : index
    %47 = vector.load %arg8[%c0_29, %c19_30] : memref<8x384xf32, #tpu.memory_space<vmem>>, vector<8x288xf32>
    tpu.vector_store %arg8[%c0_29, %c19_30], %46 {strides = array<i32>} : memref<8x384xf32, #tpu.memory_space<vmem>>, vector<8x288xf32>,
    %c1_i32 = arith.constant 1 : i32
    %c0_31 = arith.constant 0 : index
    %c0_32 = arith.constant 0 : index
    %48 = vector.load %arg8[%c0_31, %c0_32] : memref<8x384xf32, #tpu.memory_space<vmem>>, vector<8x384xf32>
    %c383_i32_33 = arith.constant 383 : i32
    %49 = tpu.dynamic_rotate %48 by %c383_i32_33 dim 1 : vector<8x384xf32>, i32 -> vector<8x384xf32>
    %c382_i32_34 = arith.constant 382 : i32
    %50 = tpu.dynamic_rotate %48 by %c382_i32_34 dim 1 : vector<8x384xf32>, i32 -> vector<8x384xf32>
    %51 = tpu.concatenate %48, %49, %50 in 0 : vector<8x384xf32>, vector<8x384xf32>, vector<8x384xf32> -> vector<24x384xf32>
    %c0_35 = arith.constant 0 : index
    %c0_36 = arith.constant 0 : index
    %52 = vector.load %arg4[%c0_35, %c0_36] : memref<24x24xf32, #tpu.memory_space<vmem>>, vector<24x24xf32>
    %cst_37 = arith.constant dense<0.000000e+00> : vector<24x384xf32>
    %53 = tpu.matmul %52, %51, %cst_37 {dimension_numbers = #tpu.dot_dimension_numbers<[1], [0], [0], [1], [0, 0, 1, 1], [], []>} : vector<24x24xf32>, vector<24x384xf32>, vector<24x384xf32> -> vector<24x384xf32>
    %54 = vector.extract_strided_slice %53 {offsets = [0, 0], sizes = [8, 384], strides = [1, 1]} : vector<24x384xf32> to vector<8x384xf32>
    %55 = vector.extract_strided_slice %53 {offsets = [8, 0], sizes = [8, 384], strides = [1, 1]} : vector<24x384xf32> to vector<8x384xf32>
    %c366_i32_38 = arith.constant 366 : i32
    %56 = tpu.dynamic_rotate %55 by %c366_i32_38 dim 1 : vector<8x384xf32>, i32 -> vector<8x384xf32>
    %57 = arith.addf %54, %56 : vector<8x384xf32>
    %58 = vector.extract_strided_slice %53 {offsets = [16, 0], sizes = [8, 384], strides = [1, 1]} : vector<24x384xf32> to vector<8x384xf32>
    %c348_i32_39 = arith.constant 348 : i32
    %59 = tpu.dynamic_rotate %58 by %c348_i32_39 dim 1 : vector<8x384xf32>, i32 -> vector<8x384xf32>
    %60 = arith.addf %57, %59 : vector<8x384xf32>
    %61 = vector.extract_strided_slice %60 {offsets = [0, 0], sizes = [8, 288], strides = [1, 1]} : vector<8x384xf32> to vector<8x288xf32>
    %62 = arith.mulf %61, %4 : vector<8x288xf32>
    %c0_40 = arith.constant 0 : index
    %c0_41 = arith.constant 0 : index
    %63 = vector.load %arg9[%c0_40, %c0_41] : memref<8x288xf32, #tpu.memory_space<vmem>>, vector<8x288xf32>
    %64 = arith.addf %62, %63 : vector<8x288xf32>
    %c0_42 = arith.constant 0 : index
    %c19_43 = arith.constant 19 : index
    %65 = vector.load %arg8[%c0_42, %c19_43] : memref<8x384xf32, #tpu.memory_space<vmem>>, vector<8x288xf32>
    tpu.vector_store %arg8[%c0_42, %c19_43], %64 {strides = array<i32>} : memref<8x384xf32, #tpu.memory_space<vmem>>, vector<8x288xf32>,
    %c0_44 = arith.constant 0 : index
    %c0_45 = arith.constant 0 : index
    %c0_46 = arith.constant 0 : index
    %66 = vector.load %arg7[%c0_44, %c0_45, %c0_46] : memref<1x8x288xf32, #tpu.memory_space<vmem>>, vector<1x8x288xf32>
    %67 = vector.shape_cast %66 : vector<1x8x288xf32> to vector<8x288xf32>
    %68 = vector.shape_cast %64 : vector<8x288xf32> to vector<1x8x288xf32>
    tpu.vector_store %arg7[%c0_44, %c0_45, %c0_46], %68 {strides = array<i32>} : memref<1x8x288xf32, #tpu.memory_space<vmem>>, vector<1x8x288xf32>,
    return
  }
  func.func @transform_0(%arg0: i32) -> (i32, i32, i32) {
    %c0_i32 = arith.constant 0 : i32
    %c0_i32_0 = arith.constant 0 : i32
    %c0_i32_1 = arith.constant 0 : i32
    return %arg0, %c0_i32, %c0_i32_0 : i32, i32, i32
  }
  func.func @transform_1(%arg0: i32) -> (i32, i32) {
    %c0_i32 = arith.constant 0 : i32
    %c0_i32_0 = arith.constant 0 : i32
    %c0_i32_1 = arith.constant 0 : i32
    return %c0_i32, %c0_i32_0 : i32, i32
  }
  func.func @transform_2(%arg0: i32) -> (i32, i32) {
    %c0_i32 = arith.constant 0 : i32
    %c0_i32_0 = arith.constant 0 : i32
    %c0_i32_1 = arith.constant 0 : i32
    return %c0_i32, %c0_i32_0 : i32, i32
  }
  func.func @transform_3(%arg0: i32) -> (i32, i32) {
    %c0_i32 = arith.constant 0 : i32
    %c0_i32_0 = arith.constant 0 : i32
    %c0_i32_1 = arith.constant 0 : i32
    return %c0_i32, %c0_i32_0 : i32, i32
  }
  func.func @transform_4(%arg0: i32) -> (i32, i32) {
    %c0_i32 = arith.constant 0 : i32
    %c0_i32_0 = arith.constant 0 : i32
    %c0_i32_1 = arith.constant 0 : i32
    return %c0_i32, %c0_i32_0 : i32, i32
  }
  func.func @transform_5(%arg0: i32) -> (i32, i32) {
    %c0_i32 = arith.constant 0 : i32
    %c0_i32_0 = arith.constant 0 : i32
    %c0_i32_1 = arith.constant 0 : i32
    return %c0_i32, %c0_i32_0 : i32, i32
  }
  func.func @transform_6(%arg0: i32) -> (i32, i32, i32) {
    %c0_i32 = arith.constant 0 : i32
    %c0_i32_0 = arith.constant 0 : i32
    %c0_i32_1 = arith.constant 0 : i32
    return %arg0, %c0_i32, %c0_i32_0 : i32, i32, i32
  }
}

</mosaic_0001>

<llo_original>
// kernel: recurrent_conv2d_forward.1
$region0: #{recurrent_conv2d_forward.1}
  #allocation0 [shape = 'u32[]', space=smem, size = 0x4, offset = 0x4, fixed_abs, tag = 'smem constant byte address 0x4 - core index']
  #allocation1 [shape = 'u32[72,128]{1,0:T(1,128)}', space=vmem, size = 0x9000, scoped, tag = 'internal scratch']
  #allocation2 [shape = 'f32[8,384]{1,0:T(8,128)}', space=vmem, size = 0x3000, scoped, tag = 'scratch operand']
  #allocation3 [shape = 'f32[8,288]{1,0:T(8,128)}', space=vmem, size = 0x3000, scoped, tag = 'scratch operand']
  %s0 = inlined_call_operand.vmem [shape: f32[2,8,384], index: 0, kind: input, shape index: {}]
  %s1 = inlined_call_operand.vmem [shape: f32[24,24], index: 1, kind: input, shape index: {}]
  %s2 = inlined_call_operand.vmem [shape: f32[8,1], index: 2, kind: input, shape index: {}]
  %s3 = inlined_call_operand.vmem [shape: f32[24,24], index: 3, kind: input, shape index: {}]
  %s4 = inlined_call_operand.vmem [shape: f32[8,1], index: 4, kind: input, shape index: {}]
  %s5 = inlined_call_operand.vmem [shape: f32[8,288], index: 5, kind: input, shape index: {}]
  %s6 = inlined_call_operand.vmem [shape: f32[2,8,288], index: 6, kind: output, shape index: {}]
  %s7 = sld [smem:[#allocation0]]
  $region57: #{recurrent_conv2d_forward.1} parent=0
    _
  %s9 = ssub.s32 1, %s7
  %s10 = scalar_select 0, %s9, %s7
  loop: start=0, step=1, limit=4
  $region2: #{recurrent_conv2d_forward.1} parent=0 // loop_pre_header
    _
  $region3: #{recurrent_conv2d_forward.1} parent=0 // loop_header
    %s12 = sphi 0, %s16
    %p13 = scmp.ge.s32.totalorder %s12, 4
    %s22 = sphi 0, %s24
    %s25 = sphi 0, %s22
    %s26 = sphi 0, %s25
    %s42 = sphi 0, %s26
    %s46 = sphi 0, %s46
    %s48 = sphi 0, %s46
    %s49 = sphi 0, %s48
    %s63 = sphi 0, %s49
    %s67 = sphi 0, %s67
    %s69 = sphi 0, %s67
    %s70 = sphi 0, %s69
    %s84 = sphi 0, %s70
    %s88 = sphi 0, %s88
    %s90 = sphi 0, %s88
    %s91 = sphi 0, %s90
    %s105 = sphi 0, %s91
    %s109 = sphi 0, %s109
    %s111 = sphi 0, %s109
    %s112 = sphi 0, %s111
    %s126 = sphi 0, %s112
    %s130 = sphi 0, %s130
    %s132 = sphi 0, %s130
    %s133 = sphi 0, %s132
    %s147 = sphi 0, %s133
    %s153 = sphi 0, %s155
    %s156 = sphi 0, %s153
    %s157 = sphi 0, %s156
    %s173 = sphi 0, %s157
  $region4: #{recurrent_conv2d_forward.1} parent=0 // loop_header_branch
    %15 = sbr.rel (%p13) target = $region8
  $region5: #{recurrent_conv2d_forward.1} parent=0 // loop_body
    %s17 = ssub.s32 %s12, 1
    %s18 = ssub.s32 %s12, 2
    %s19 = sadd.s32 %s12, 1
    %s20 = ssub.s32 %s12, %s19
    %p21 = scmp.eq.s32.totalorder %s20, 0
    %s23 = sadd.s32 %s22, 1
    %s24 = scalar_select %p21, %s22, %s23
    %p27 = pneg %p21
    %p28 = scmp.eq.s32.totalorder %s12, 1
    %p29 = por %p27, %p28
    %p30 = scmp.ne.s32.totalorder %s22, %s25
    %p31 = scmp.eq.s32.totalorder %s12, 0
    %p32 = por %p30, %p31
    %p33 = scmp.ne.s32.totalorder %s22, %s25
    %p34 = scmp.eq.s32.totalorder %s17, 1
    %p35 = por %p33, %p34
    %p36 = scmp.ne.s32.totalorder %s25, %s26
    %p37 = scmp.eq.s32.totalorder %s17, 0
    %p38 = por %p36, %p37
    %p39 = scmp.ne.s32.totalorder %s25, %s26
    %p40 = scmp.eq.s32.totalorder %s18, 1
    %p41 = por %p39, %p40
    %p43 = scmp.ne.s32.totalorder %s26, %s42
    %p44 = scmp.eq.s32.totalorder %s18, 0
    %p45 = por %p43, %p44
    %s47 = sadd.s32 %s46, 1
    %p50 = scmp.eq.s32.totalorder %s12, 1
    %p51 = scmp.ne.s32.totalorder %s46, %s48
    %p52 = scmp.eq.s32.totalorder %s12, 0
    %p53 = por %p51, %p52
    %p54 = scmp.ne.s32.totalorder %s46, %s48
    %p55 = scmp.eq.s32.totalorder %s17, 1
    %p56 = por %p54, %p55
    %p57 = scmp.ne.s32.totalorder %s48, %s49
    %p58 = scmp.eq.s32.totalorder %s17, 0
    %p59 = por %p57, %p58
    %p60 = scmp.ne.s32.totalorder %s48, %s49
    %p61 = scmp.eq.s32.totalorder %s18, 1
    %p62 = por %p60, %p61
    %p64 = scmp.ne.s32.totalorder %s49, %s63
    %p65 = scmp.eq.s32.totalorder %s18, 0
    %p66 = por %p64, %p65
    %s68 = sadd.s32 %s67, 1
    %p71 = scmp.eq.s32.totalorder %s12, 1
    %p72 = scmp.ne.s32.totalorder %s67, %s69
    %p73 = scmp.eq.s32.totalorder %s12, 0
    %p74 = por %p72, %p73
    %p75 = scmp.ne.s32.totalorder %s67, %s69
    %p76 = scmp.eq.s32.totalorder %s17, 1
    %p77 = por %p75, %p76
    %p78 = scmp.ne.s32.totalorder %s69, %s70
    %p79 = scmp.eq.s32.totalorder %s17, 0
    %p80 = por %p78, %p79
    %p81 = scmp.ne.s32.totalorder %s69, %s70
    %p82 = scmp.eq.s32.totalorder %s18, 1
    %p83 = por %p81, %p82
    %p85 = scmp.ne.s32.totalorder %s70, %s84
    %p86 = scmp.eq.s32.totalorder %s18, 0
    %p87 = por %p85, %p86
    %s89 = sadd.s32 %s88, 1
    %p92 = scmp.eq.s32.totalorder %s12, 1
    %p93 = scmp.ne.s32.totalorder %s88, %s90
    %p94 = scmp.eq.s32.totalorder %s12, 0
    %p95 = por %p93, %p94
    %p96 = scmp.ne.s32.totalorder %s88, %s90
    %p97 = scmp.eq.s32.totalorder %s17, 1
    %p98 = por %p96, %p97
    %p99 = scmp.ne.s32.totalorder %s90, %s91
    %p100 = scmp.eq.s32.totalorder %s17, 0
    %p101 = por %p99, %p100
    %p102 = scmp.ne.s32.totalorder %s90, %s91
    %p103 = scmp.eq.s32.totalorder %s18, 1
    %p104 = por %p102, %p103
    %p106 = scmp.ne.s32.totalorder %s91, %s105
    %p107 = scmp.eq.s32.totalorder %s18, 0
    %p108 = por %p106, %p107
    %s110 = sadd.s32 %s109, 1
    %p113 = scmp.eq.s32.totalorder %s12, 1
    %p114 = scmp.ne.s32.totalorder %s109, %s111
    %p115 = scmp.eq.s32.totalorder %s12, 0
    %p116 = por %p114, %p115
    %p117 = scmp.ne.s32.totalorder %s109, %s111
    %p118 = scmp.eq.s32.totalorder %s17, 1
    %p119 = por %p117, %p118
    %p120 = scmp.ne.s32.totalorder %s111, %s112
    %p121 = scmp.eq.s32.totalorder %s17, 0
    %p122 = por %p120, %p121
    %p123 = scmp.ne.s32.totalorder %s111, %s112
    %p124 = scmp.eq.s32.totalorder %s18, 1
    %p125 = por %p123, %p124
    %p127 = scmp.ne.s32.totalorder %s112, %s126
    %p128 = scmp.eq.s32.totalorder %s18, 0
    %p129 = por %p127, %p128
    %s131 = sadd.s32 %s130, 1
    %p134 = scmp.eq.s32.totalorder %s12, 1
    %p135 = scmp.ne.s32.totalorder %s130, %s132
    %p136 = scmp.eq.s32.totalorder %s12, 0
    %p137 = por %p135, %p136
    %p138 = scmp.ne.s32.totalorder %s130, %s132
    %p139 = scmp.eq.s32.totalorder %s17, 1
    %p140 = por %p138, %p139
    %p141 = scmp.ne.s32.totalorder %s132, %s133
    %p142 = scmp.eq.s32.totalorder %s17, 0
    %p143 = por %p141, %p142
    %p144 = scmp.ne.s32.totalorder %s132, %s133
    %p145 = scmp.eq.s32.totalorder %s18, 1
    %p146 = por %p144, %p145
    %p148 = scmp.ne.s32.totalorder %s133, %s147
    %p149 = scmp.eq.s32.totalorder %s18, 0
    %p150 = por %p148, %p149
    %s151 = ssub.s32 %s12, %s19
    %p152 = scmp.eq.s32.totalorder %s151, 0
    %s154 = sadd.s32 %s153, 1
    %s155 = scalar_select %p152, %s153, %s154
    %p158 = pneg %p152
    %p159 = scmp.eq.s32.totalorder %s12, 1
    %p160 = por %p158, %p159
    %p161 = scmp.ne.s32.totalorder %s153, %s156
    %p162 = scmp.eq.s32.totalorder %s12, 0
    %p163 = por %p161, %p162
    %p164 = scmp.ne.s32.totalorder %s153, %s156
    %p165 = scmp.eq.s32.totalorder %s17, 1
    %p166 = por %p164, %p165
    %p167 = scmp.ne.s32.totalorder %s156, %s157
    %p168 = scmp.eq.s32.totalorder %s17, 0
    %p169 = por %p167, %p168
    %p170 = scmp.ne.s32.totalorder %s156, %s157
    %p171 = scmp.eq.s32.totalorder %s18, 1
    %p172 = por %p170, %p171
    %p174 = scmp.ne.s32.totalorder %s157, %s173
    %p175 = scmp.eq.s32.totalorder %s18, 0
    %p176 = por %p174, %p175
    %p177 = scmp.le.s32.totalorder 1, %s12
    %p178 = scmp.lt.s32.totalorder %s12, 3
    %p179 = pnand %p177, %p178
    %p180 = pneg %p179
    // Predicated region
    $region9: #{recurrent_conv2d_forward.1} parent=5 // pred_check
      _
    $region10: #{recurrent_conv2d_forward.1} parent=5 // pred_check_branch
      %182 = sbr.rel (%p179) target = $region12
    $region11: #{recurrent_conv2d_forward.1} parent=5 // pred_region
      %s183 = ssub.s32 %s12, 1
      // Predicated region
      $region13: #{recurrent_conv2d_forward.1} parent=11 // pred_check
        %p184 = pneg %p59
      $region14: #{recurrent_conv2d_forward.1} parent=11 // pred_check_branch
        %186 = sbr.rel (%p184) target = $region16
      $region15: #{recurrent_conv2d_forward.1} parent=11 // pred_region
        _
      $region16: #{recurrent_conv2d_forward.1} parent=11 // pred_fallthru
        _
      // Predicated region
      $region17: #{recurrent_conv2d_forward.1} parent=11 // pred_check
        %p187 = pneg %p80
      $region18: #{recurrent_conv2d_forward.1} parent=11 // pred_check_branch
        %189 = sbr.rel (%p187) target = $region20
      $region19: #{recurrent_conv2d_forward.1} parent=11 // pred_region
        _
      $region20: #{recurrent_conv2d_forward.1} parent=11 // pred_fallthru
        _
      // Predicated region
      $region21: #{recurrent_conv2d_forward.1} parent=11 // pred_check
        %p190 = pneg %p101
      $region22: #{recurrent_conv2d_forward.1} parent=11 // pred_check_branch
        %192 = sbr.rel (%p190) target = $region24
      $region23: #{recurrent_conv2d_forward.1} parent=11 // pred_region
        _
      $region24: #{recurrent_conv2d_forward.1} parent=11 // pred_fallthru
        _
      // Predicated region
      $region25: #{recurrent_conv2d_forward.1} parent=11 // pred_check
        %p193 = pneg %p122
      $region26: #{recurrent_conv2d_forward.1} parent=11 // pred_check_branch
        %195 = sbr.rel (%p193) target = $region28
      $region27: #{recurrent_conv2d_forward.1} parent=11 // pred_region
        _
      $region28: #{recurrent_conv2d_forward.1} parent=11 // pred_fallthru
        _
      // Predicated region
      $region29: #{recurrent_conv2d_forward.1} parent=11 // pred_check
        %p196 = pneg %p143
      $region30: #{recurrent_conv2d_forward.1} parent=11 // pred_check_branch
        %198 = sbr.rel (%p196) target = $region32
      $region31: #{recurrent_conv2d_forward.1} parent=11 // pred_region
        _
      $region32: #{recurrent_conv2d_forward.1} parent=11 // pred_fallthru
        _
    $region12: #{recurrent_conv2d_forward.1} parent=5 // pred_fallthru
      _
    %p199 = scmp.lt.s32.totalorder %s12, 2
    // Predicated region
    $region33: #{recurrent_conv2d_forward.1} parent=5 // pred_check
      %p200 = pneg %p199
    $region34: #{recurrent_conv2d_forward.1} parent=5 // pred_check_branch
      %202 = sbr.rel (%p200) target = $region36
    $region35: #{recurrent_conv2d_forward.1} parent=5 // pred_region
      // Predicated region
      $region37: #{recurrent_conv2d_forward.1} parent=35 // pred_check
        %p203 = pneg %p32
      $region38: #{recurrent_conv2d_forward.1} parent=35 // pred_check_branch
        %205 = sbr.rel (%p203) target = $region40
      $region39: #{recurrent_conv2d_forward.1} parent=35 // pred_region
        %p206 = scmp.lt.s32.totalorder %s12, 1
        %s207 = scalar_select %p206, %s12, 1
        %s208 = smul.addr %s207, 3
        %s209 = smul.addr %s208, 8
        %s210 = scalar_lea.vmem %s0, %s209
      $region40: #{recurrent_conv2d_forward.1} parent=35 // pred_fallthru
        _
    $region36: #{recurrent_conv2d_forward.1} parent=5 // pred_fallthru
      _
    %p211 = scmp.le.s32.totalorder 1, %s12
    %p212 = scmp.lt.s32.totalorder %s12, 3
    %p213 = pnand %p211, %p212
    %p214 = pneg %p213
    // Predicated region
    $region41: #{recurrent_conv2d_forward.1} parent=5 // pred_check
      _
    $region42: #{recurrent_conv2d_forward.1} parent=5 // pred_check_branch
      %216 = sbr.rel (%p213) target = $region44
    $region43: #{recurrent_conv2d_forward.1} parent=5 // pred_region
      %s217 = ssub.s32 %s12, 1
      %p218 = scmp.lt.s32.totalorder %s17, 1
      %s219 = scalar_select %p218, %s17, 1
      %s220 = smul.addr %s219, 3
      %s221 = smul.addr %s220, 8
      %s222 = scalar_lea.vmem %s0, %s221
      %p223 = pneg %p38
      %p224 = pneg %p35
      %p225 = pneg %p59
      %p226 = pneg %p56
      %p227 = pneg %p80
      %p228 = pneg %p77
      %p229 = pneg %p101
      %p230 = pneg %p98
      %p231 = pneg %p122
      %p232 = pneg %p119
      %p233 = pneg %p143
      %p234 = pneg %p140
      %p235 = pneg %p169
      %p236 = pneg %p166
      %p237 = scmp.lt.s32.totalorder %s17, 1
      %s238 = scalar_select %p237, %s17, 1
      %s239 = smul.addr %s238, 3
      %s240 = smul.addr %s239, 8
      %s241 = scalar_lea.vmem %s6, %s240
      %p242 = scmp.lt.s32.totalorder %s17, 1
      %s243 = scalar_select %p242, %s17, 1
      %s244 = smul.addr %s243, 3
      %s245 = smul.addr %s244, 8
      %s246 = scalar_lea.vmem %s0, %s245
      %p247 = scmp.lt.s32.totalorder %s17, 1
      %s248 = scalar_select %p247, %s17, 1
      %s249 = smul.addr %s248, 3
      %s250 = smul.addr %s249, 8
      %s251 = scalar_lea.vmem %s6, %s250
      %252 = vst [vmem:[#allocation2] sm:$0xff] 0.0
      %253 = vst [vmem:[#allocation2 + $0x10] sm:$0xff] 0.0
      %v254 = vld [vmem:[%s5] sm:$0xff]
      %v255 = vld [vmem:[%s5 + $0x8] sm:$0xff]
      %v256 = vld [vmem:[%s5 + $0x10] sm:$0xff]
      %v257 = vld [vmem:[%s246] sm:$0xff]
      %v258 = vld [vmem:[%s246 + $0x8] sm:$0xff]
      %v259 = vld [vmem:[%s246 + $0x10] sm:$0xff]
      %260 = vrot.lane.b32.xlu0 %v257, 127
      %v261 = vpop.permute.xlu0 %260
      %262 = vrot.lane.b32.xlu0 %v258, 127
      %v263 = vpop.permute.xlu0 %262
      %264 = vrot.lane.b32.xlu0 %v259, 127
      %v265 = vpop.permute.xlu0 %264
      %v266 = vlaneseq
      %v267 = vand.u32 %v266, 127
      %vm268 = vcmp.lt.s32.totalorder %v267, 127
      %v269 = vsel %vm268, %v263, %v265
      %v270 = vsel %vm268, %v261, %v263
      %v271 = vsel %vm268, %v265, %v261
      %272 = vrot.lane.b32.xlu0 %v257, 126
      %v273 = vpop.permute.xlu0 %272
      %274 = vrot.lane.b32.xlu0 %v258, 126
      %v275 = vpop.permute.xlu0 %274
      %276 = vrot.lane.b32.xlu0 %v259, 126
      %v277 = vpop.permute.xlu0 %276
      %vm278 = vcmp.lt.s32.totalorder %v267, 126
      %v279 = vsel %vm278, %v275, %v277
      %v280 = vsel %vm278, %v273, %v275
      %v281 = vsel %vm278, %v277, %v273
      %v282 = vld [vmem:[%s1] sm:$0xff]
      %v283 = vld [vmem:[%s1 + $0x8] sm:$0xff]
      %v284 = vld [vmem:[%s1 + $0x10] sm:$0xff]
      %vm285 = vcmask 195584
      %v287 = vsel %vm285, %v282, 0
      %v290 = vsel %vm285, %v283, 0
      %v293 = vsel %vm285, %v284, 0
      %295 = vmatpush.msra.mxu0 0.0
      %296 = vmatpush.msra.mxu0 0.0
      %297 = vmatpush.msra.mxu0 0.0
      %298 = vmatpush.msra.mxu0 0.0
      %299 = vmatpush.msra.mxu0 0.0
      %300 = vmatpush.msra.mxu0 0.0
      %301 = vmatpush.msra.mxu0 0.0
      %302 = vmatpush.msra.mxu0 0.0
      %303 = vmatpush.msra.mxu0 0.0
      %304 = vmatpush.msra.mxu0 0.0
      %305 = vmatpush.msra.mxu0 0.0
      %306 = vmatpush.msra.mxu0 0.0
      %307 = vmatpush.msra.mxu0 0.0
      %308 = vmatpush.msra.mxu0 %v280
      %309 = vmatpush.msra.mxu0 %v270
      %310 = vmatpush.msra.mxu0 %v257
      %311 = vmatmul.f32.gmra.mxu0 %v287
      %v312 = vpop.f32.mrf.mxu0
      %v313 = vadd.f32 0.0, %v312
      %314 = vmatmul.f32.gmra.mxu0 %v290
      %v315 = vpop.f32.mrf.mxu0
      %v316 = vadd.f32 0.0, %v315
      %317 = vmatmul.f32.gmra.mxu0 %v293
      %v318 = vpop.f32.mrf.mxu0
      %v319 = vadd.f32 0.0, %v318
      %320 = vdwg.mxu0
      %321 = vmatpush.msra.mxu0 0.0
      %322 = vmatpush.msra.mxu0 0.0
      %323 = vmatpush.msra.mxu0 0.0
      %324 = vmatpush.msra.mxu0 0.0
      %325 = vmatpush.msra.mxu0 0.0
      %326 = vmatpush.msra.mxu0 0.0
      %327 = vmatpush.msra.mxu0 0.0
      %328 = vmatpush.msra.mxu0 0.0
      %329 = vmatpush.msra.mxu0 0.0
      %330 = vmatpush.msra.mxu0 0.0
      %331 = vmatpush.msra.mxu0 0.0
      %332 = vmatpush.msra.mxu0 0.0
      %333 = vmatpush.msra.mxu0 0.0
      %334 = vmatpush.msra.mxu0 %v279
      %335 = vmatpush.msra.mxu0 %v269
      %336 = vmatpush.msra.mxu0 %v258
      %337 = vmatmul.f32.gmra.mxu0 %v287
      %v338 = vpop.f32.mrf.mxu0
      %v339 = vadd.f32 0.0, %v338
      %340 = vmatmul.f32.gmra.mxu0 %v290
      %v341 = vpop.f32.mrf.mxu0
      %v342 = vadd.f32 0.0, %v341
      %343 = vmatmul.f32.gmra.mxu0 %v293
      %v344 = vpop.f32.mrf.mxu0
      %v345 = vadd.f32 0.0, %v344
      %346 = vdwg.mxu0
      %347 = vmatpush.msra.mxu0 0.0
      %348 = vmatpush.msra.mxu0 0.0
      %349 = vmatpush.msra.mxu0 0.0
      %350 = vmatpush.msra.mxu0 0.0
      %351 = vmatpush.msra.mxu0 0.0
      %352 = vmatpush.msra.mxu0 0.0
      %353 = vmatpush.msra.mxu0 0.0
      %354 = vmatpush.msra.mxu0 0.0
      %355 = vmatpush.msra.mxu0 0.0
      %356 = vmatpush.msra.mxu0 0.0
      %357 = vmatpush.msra.mxu0 0.0
      %358 = vmatpush.msra.mxu0 0.0
      %359 = vmatpush.msra.mxu0 0.0
      %360 = vmatpush.msra.mxu0 %v281
      %361 = vmatpush.msra.mxu0 %v271
      %362 = vmatpush.msra.mxu0 %v259
      %363 = vmatmul.f32.gmra.mxu0 %v287
      %v364 = vpop.f32.mrf.mxu0
      %v365 = vadd.f32 0.0, %v364
      %366 = vmatmul.f32.gmra.mxu0 %v290
      %v367 = vpop.f32.mrf.mxu0
      %v368 = vadd.f32 0.0, %v367
      %369 = vmatmul.f32.gmra.mxu0 %v293
      %v370 = vpop.f32.mrf.mxu0
      %v371 = vadd.f32 0.0, %v370
      %372 = vdwg.mxu0
      %373 = vrot.lane.b32.xlu0 %v316, 110
      %v374 = vpop.permute.xlu0 %373
      %375 = vrot.lane.b32.xlu0 %v342, 110
      %v376 = vpop.permute.xlu0 %375
      %377 = vrot.lane.b32.xlu0 %v368, 110
      %v378 = vpop.permute.xlu0 %377
      %vm379 = vcmp.lt.s32.totalorder %v267, 110
      %v380 = vsel %vm379, %v376, %v378
      %v381 = vsel %vm379, %v374, %v376
      %v382 = vsel %vm379, %v378, %v374
      %v383 = vadd.f32 %v313, %v381
      %v384 = vadd.f32 %v339, %v380
      %v385 = vadd.f32 %v365, %v382
      %386 = vrot.lane.b32.xlu0 %v319, 92
      %v387 = vpop.permute.xlu0 %386
      %388 = vrot.lane.b32.xlu0 %v345, 92
      %v389 = vpop.permute.xlu0 %388
      %390 = vrot.lane.b32.xlu0 %v371, 92
      %v391 = vpop.permute.xlu0 %390
      %vm392 = vcmp.lt.s32.totalorder %v267, 92
      %v393 = vsel %vm392, %v389, %v391
      %v394 = vsel %vm392, %v387, %v389
      %v395 = vsel %vm392, %v391, %v387
      %v396 = vadd.f32 %v383, %v394
      %v397 = vadd.f32 %v384, %v393
      %v398 = vadd.f32 %v385, %v395
      %v399 = vld [vmem:[%s2] sm:$0xff]
      %401 = vset.pattern.permute.xlu0 0
      %402 = vperm.xlu0 %401, %v399
      %v403 = vpop.permute.xlu0 %402
      %v405 = vadd.f32 %v396, %v403
      %v406 = vadd.f32 %v397, %v403
      %v407 = vadd.f32 %v398, %v403
      %v408 = vmul.f32 %v405, %v254
      %v409 = vmul.f32 %v406, %v255
      %v410 = vmul.f32 %v407, %v256
      %v411 = vld [vmem:[%s4] sm:$0xff]
      %413 = vset.pattern.permute.xlu0 0
      %414 = vperm.xlu0 %413, %v411
      %v415 = vpop.permute.xlu0 %414
      %v417 = vmul.f32 %v415, %v254
      %v418 = vmul.f32 %v415, %v255
      %v419 = vmul.f32 %v415, %v256
      %v420 = vadd.f32 %v408, %v417
      %v421 = vadd.f32 %v409, %v418
      %v422 = vadd.f32 %v410, %v419
      %423 = vst [vmem:[#allocation3] sm:$0xff] %v420
      %424 = vst [vmem:[#allocation3 + $0x8] sm:$0xff] %v421
      %vm425 = vcmask 261120
      %426 = vst.msk [vmem:[#allocation3 + $0x10] sm:$0xff] %vm425, %v422
      %430 = vrot.lane.b32.xlu0 %v408, 19
      %v431 = vpop.permute.xlu0 %430
      %432 = vrot.lane.b32.xlu0 %v409, 19
      %v433 = vpop.permute.xlu0 %432
      %434 = vrot.lane.b32.xlu0 %v410, 19
      %v435 = vpop.permute.xlu0 %434
      %vm436 = vcmask 154624
      %v437 = vsel %vm436, %v431, %v433
      %v438 = vsel %vm436, %v433, %v435
      %vm442 = vcmask 1047704
      %443 = vst.msk [vmem:[#allocation2] sm:$0xff] %vm442, %v431
      %444 = vst [vmem:[#allocation2 + $0x8] sm:$0xff] %v437
      %vm445 = vcmask 416768
      %446 = vst.msk [vmem:[#allocation2 + $0x10] sm:$0xff] %vm445, %v438
      %v447 = vld [vmem:[#allocation2] sm:$0xff]
      %v448 = vld [vmem:[#allocation2 + $0x8] sm:$0xff]
      %v449 = vld [vmem:[#allocation2 + $0x10] sm:$0xff]
      %450 = vrot.lane.b32.xlu0 %v447, 127
      %v451 = vpop.permute.xlu0 %450
      %452 = vrot.lane.b32.xlu0 %v448, 127
      %v453 = vpop.permute.xlu0 %452
      %454 = vrot.lane.b32.xlu0 %v449, 127
      %v455 = vpop.permute.xlu0 %454
      %v456 = vsel %vm268, %v453, %v455
      %v457 = vsel %vm268, %v451, %v453
      %v458 = vsel %vm268, %v455, %v451
      %459 = vrot.lane.b32.xlu0 %v447, 126
      %v460 = vpop.permute.xlu0 %459
      %461 = vrot.lane.b32.xlu0 %v448, 126
      %v462 = vpop.permute.xlu0 %461
      %463 = vrot.lane.b32.xlu0 %v449, 126
      %v464 = vpop.permute.xlu0 %463
      %v465 = vsel %vm278, %v462, %v464
      %v466 = vsel %vm278, %v460, %v462
      %v467 = vsel %vm278, %v464, %v460
      %v468 = vld [vmem:[%s3] sm:$0xff]
      %v469 = vld [vmem:[%s3 + $0x8] sm:$0xff]
      %v470 = vld [vmem:[%s3 + $0x10] sm:$0xff]
      %v472 = vsel %vm285, %v468, 0
      %v475 = vsel %vm285, %v469, 0
      %v478 = vsel %vm285, %v470, 0
      %480 = vmatpush.msra.mxu0 0.0
      %481 = vmatpush.msra.mxu0 0.0
      %482 = vmatpush.msra.mxu0 0.0
      %483 = vmatpush.msra.mxu0 0.0
      %484 = vmatpush.msra.mxu0 0.0
      %485 = vmatpush.msra.mxu0 0.0
      %486 = vmatpush.msra.mxu0 0.0
      %487 = vmatpush.msra.mxu0 0.0
      %488 = vmatpush.msra.mxu0 0.0
      %489 = vmatpush.msra.mxu0 0.0
      %490 = vmatpush.msra.mxu0 0.0
      %491 = vmatpush.msra.mxu0 0.0
      %492 = vmatpush.msra.mxu0 0.0
      %493 = vmatpush.msra.mxu0 %v466
      %494 = vmatpush.msra.mxu0 %v457
      %495 = vmatpush.msra.mxu0 %v447
      %496 = vmatmul.f32.gmra.mxu0 %v472
      %v497 = vpop.f32.mrf.mxu0
      %v498 = vadd.f32 0.0, %v497
      %499 = vmatmul.f32.gmra.mxu0 %v475
      %v500 = vpop.f32.mrf.mxu0
      %v501 = vadd.f32 0.0, %v500
      %502 = vmatmul.f32.gmra.mxu0 %v478
      %v503 = vpop.f32.mrf.mxu0
      %v504 = vadd.f32 0.0, %v503
      %505 = vdwg.mxu0
      %506 = vmatpush.msra.mxu0 0.0
      %507 = vmatpush.msra.mxu0 0.0
      %508 = vmatpush.msra.mxu0 0.0
      %509 = vmatpush.msra.mxu0 0.0
      %510 = vmatpush.msra.mxu0 0.0
      %511 = vmatpush.msra.mxu0 0.0
      %512 = vmatpush.msra.mxu0 0.0
      %513 = vmatpush.msra.mxu0 0.0
      %514 = vmatpush.msra.mxu0 0.0
      %515 = vmatpush.msra.mxu0 0.0
      %516 = vmatpush.msra.mxu0 0.0
      %517 = vmatpush.msra.mxu0 0.0
      %518 = vmatpush.msra.mxu0 0.0
      %519 = vmatpush.msra.mxu0 %v465
      %520 = vmatpush.msra.mxu0 %v456
      %521 = vmatpush.msra.mxu0 %v448
      %522 = vmatmul.f32.gmra.mxu0 %v472
      %v523 = vpop.f32.mrf.mxu0
      %v524 = vadd.f32 0.0, %v523
      %525 = vmatmul.f32.gmra.mxu0 %v475
      %v526 = vpop.f32.mrf.mxu0
      %v527 = vadd.f32 0.0, %v526
      %528 = vmatmul.f32.gmra.mxu0 %v478
      %v529 = vpop.f32.mrf.mxu0
      %v530 = vadd.f32 0.0, %v529
      %531 = vdwg.mxu0
      %532 = vmatpush.msra.mxu0 0.0
      %533 = vmatpush.msra.mxu0 0.0
      %534 = vmatpush.msra.mxu0 0.0
      %535 = vmatpush.msra.mxu0 0.0
      %536 = vmatpush.msra.mxu0 0.0
      %537 = vmatpush.msra.mxu0 0.0
      %538 = vmatpush.msra.mxu0 0.0
      %539 = vmatpush.msra.mxu0 0.0
      %540 = vmatpush.msra.mxu0 0.0
      %541 = vmatpush.msra.mxu0 0.0
      %542 = vmatpush.msra.mxu0 0.0
      %543 = vmatpush.msra.mxu0 0.0
      %544 = vmatpush.msra.mxu0 0.0
      %545 = vmatpush.msra.mxu0 %v467
      %546 = vmatpush.msra.mxu0 %v458
      %547 = vmatpush.msra.mxu0 %v449
      %548 = vmatmul.f32.gmra.mxu0 %v472
      %v549 = vpop.f32.mrf.mxu0
      %v550 = vadd.f32 0.0, %v549
      %551 = vmatmul.f32.gmra.mxu0 %v475
      %v552 = vpop.f32.mrf.mxu0
      %v553 = vadd.f32 0.0, %v552
      %554 = vmatmul.f32.gmra.mxu0 %v478
      %v555 = vpop.f32.mrf.mxu0
      %v556 = vadd.f32 0.0, %v555
      %557 = vdwg.mxu0
      %558 = vrot.lane.b32.xlu0 %v501, 110
      %v559 = vpop.permute.xlu0 %558
      %560 = vrot.lane.b32.xlu0 %v527, 110
      %v561 = vpop.permute.xlu0 %560
      %562 = vrot.lane.b32.xlu0 %v553, 110
      %v563 = vpop.permute.xlu0 %562
      %v564 = vsel %vm379, %v561, %v563
      %v565 = vsel %vm379, %v559, %v561
      %v566 = vsel %vm379, %v563, %v559
      %v567 = vadd.f32 %v498, %v565
      %v568 = vadd.f32 %v524, %v564
      %v569 = vadd.f32 %v550, %v566
      %570 = vrot.lane.b32.xlu0 %v504, 92
      %v571 = vpop.permute.xlu0 %570
      %572 = vrot.lane.b32.xlu0 %v530, 92
      %v573 = vpop.permute.xlu0 %572
      %574 = vrot.lane.b32.xlu0 %v556, 92
      %v575 = vpop.permute.xlu0 %574
      %v576 = vsel %vm392, %v573, %v575
      %v577 = vsel %vm392, %v571, %v573
      %v578 = vsel %vm392, %v575, %v571
      %v579 = vadd.f32 %v567, %v577
      %v580 = vadd.f32 %v568, %v576
      %v581 = vadd.f32 %v569, %v578
      %v582 = vmul.f32 %v579, %v254
      %v583 = vmul.f32 %v580, %v255
      %v584 = vmul.f32 %v581, %v256
      %v585 = vld [vmem:[#allocation3] sm:$0xff]
      %v586 = vld [vmem:[#allocation3 + $0x8] sm:$0xff]
      %v587 = vld [vmem:[#allocation3 + $0x10] sm:$0xff]
      %v588 = vadd.f32 %v582, %v585
      %v589 = vadd.f32 %v583, %v586
      %v590 = vadd.f32 %v584, %v587
      %594 = vrot.lane.b32.xlu0 %v588, 19
      %v595 = vpop.permute.xlu0 %594
      %596 = vrot.lane.b32.xlu0 %v589, 19
      %v597 = vpop.permute.xlu0 %596
      %598 = vrot.lane.b32.xlu0 %v590, 19
      %v599 = vpop.permute.xlu0 %598
      %v600 = vsel %vm436, %v595, %v597
      %v601 = vsel %vm436, %v597, %v599
      %605 = vst.msk [vmem:[#allocation2] sm:$0xff] %vm442, %v595
      %606 = vst [vmem:[#allocation2 + $0x8] sm:$0xff] %v600
      %607 = vst.msk [vmem:[#allocation2 + $0x10] sm:$0xff] %vm445, %v601
      %v608 = vld [vmem:[#allocation2] sm:$0xff]
      %v609 = vld [vmem:[#allocation2 + $0x8] sm:$0xff]
      %v610 = vld [vmem:[#allocation2 + $0x10] sm:$0xff]
      %611 = vrot.lane.b32.xlu0 %v608, 127
      %v612 = vpop.permute.xlu0 %611
      %613 = vrot.lane.b32.xlu0 %v609, 127
      %v614 = vpop.permute.xlu0 %613
      %615 = vrot.lane.b32.xlu0 %v610, 127
      %v616 = vpop.permute.xlu0 %615
      %v617 = vsel %vm268, %v614, %v616
      %v618 = vsel %vm268, %v612, %v614
      %v619 = vsel %vm268, %v616, %v612
      %620 = vrot.lane.b32.xlu0 %v608, 126
      %v621 = vpop.permute.xlu0 %620
      %622 = vrot.lane.b32.xlu0 %v609, 126
      %v623 = vpop.permute.xlu0 %622
      %624 = vrot.lane.b32.xlu0 %v610, 126
      %v625 = vpop.permute.xlu0 %624
      %v626 = vsel %vm278, %v623, %v625
      %v627 = vsel %vm278, %v621, %v623
      %v628 = vsel %vm278, %v625, %v621
      %v629 = vld [vmem:[%s3] sm:$0xff]
      %v630 = vld [vmem:[%s3 + $0x8] sm:$0xff]
      %v631 = vld [vmem:[%s3 + $0x10] sm:$0xff]
      %v633 = vsel %vm285, %v629, 0
      %v636 = vsel %vm285, %v630, 0
      %v639 = vsel %vm285, %v631, 0
      %641 = vmatpush.msra.mxu0 0.0
      %642 = vmatpush.msra.mxu0 0.0
      %643 = vmatpush.msra.mxu0 0.0
      %644 = vmatpush.msra.mxu0 0.0
      %645 = vmatpush.msra.mxu0 0.0
      %646 = vmatpush.msra.mxu0 0.0
      %647 = vmatpush.msra.mxu0 0.0
      %648 = vmatpush.msra.mxu0 0.0
      %649 = vmatpush.msra.mxu0 0.0
      %650 = vmatpush.msra.mxu0 0.0
      %651 = vmatpush.msra.mxu0 0.0
      %652 = vmatpush.msra.mxu0 0.0
      %653 = vmatpush.msra.mxu0 0.0
      %654 = vmatpush.msra.mxu0 %v627
      %655 = vmatpush.msra.mxu0 %v618
      %656 = vmatpush.msra.mxu0 %v608
      %657 = vmatmul.f32.gmra.mxu0 %v633
      %v658 = vpop.f32.mrf.mxu0
      %v659 = vadd.f32 0.0, %v658
      %660 = vmatmul.f32.gmra.mxu0 %v636
      %v661 = vpop.f32.mrf.mxu0
      %v662 = vadd.f32 0.0, %v661
      %663 = vmatmul.f32.gmra.mxu0 %v639
      %v664 = vpop.f32.mrf.mxu0
      %v665 = vadd.f32 0.0, %v664
      %666 = vdwg.mxu0
      %667 = vmatpush.msra.mxu0 0.0
      %668 = vmatpush.msra.mxu0 0.0
      %669 = vmatpush.msra.mxu0 0.0
      %670 = vmatpush.msra.mxu0 0.0
      %671 = vmatpush.msra.mxu0 0.0
      %672 = vmatpush.msra.mxu0 0.0
      %673 = vmatpush.msra.mxu0 0.0
      %674 = vmatpush.msra.mxu0 0.0
      %675 = vmatpush.msra.mxu0 0.0
      %676 = vmatpush.msra.mxu0 0.0
      %677 = vmatpush.msra.mxu0 0.0
      %678 = vmatpush.msra.mxu0 0.0
      %679 = vmatpush.msra.mxu0 0.0
      %680 = vmatpush.msra.mxu0 %v626
      %681 = vmatpush.msra.mxu0 %v617
      %682 = vmatpush.msra.mxu0 %v609
      %683 = vmatmul.f32.gmra.mxu0 %v633
      %v684 = vpop.f32.mrf.mxu0
      %v685 = vadd.f32 0.0, %v684
      %686 = vmatmul.f32.gmra.mxu0 %v636
      %v687 = vpop.f32.mrf.mxu0
      %v688 = vadd.f32 0.0, %v687
      %689 = vmatmul.f32.gmra.mxu0 %v639
      %v690 = vpop.f32.mrf.mxu0
      %v691 = vadd.f32 0.0, %v690
      %692 = vdwg.mxu0
      %693 = vmatpush.msra.mxu0 0.0
      %694 = vmatpush.msra.mxu0 0.0
      %695 = vmatpush.msra.mxu0 0.0
      %696 = vmatpush.msra.mxu0 0.0
      %697 = vmatpush.msra.mxu0 0.0
      %698 = vmatpush.msra.mxu0 0.0
      %699 = vmatpush.msra.mxu0 0.0
      %700 = vmatpush.msra.mxu0 0.0
      %701 = vmatpush.msra.mxu0 0.0
      %702 = vmatpush.msra.mxu0 0.0
      %703 = vmatpush.msra.mxu0 0.0
      %704 = vmatpush.msra.mxu0 0.0
      %705 = vmatpush.msra.mxu0 0.0
      %706 = vmatpush.msra.mxu0 %v628
      %707 = vmatpush.msra.mxu0 %v619
      %708 = vmatpush.msra.mxu0 %v610
      %709 = vmatmul.f32.gmra.mxu0 %v633
      %v710 = vpop.f32.mrf.mxu0
      %v711 = vadd.f32 0.0, %v710
      %712 = vmatmul.f32.gmra.mxu0 %v636
      %v713 = vpop.f32.mrf.mxu0
      %v714 = vadd.f32 0.0, %v713
      %715 = vmatmul.f32.gmra.mxu0 %v639
      %v716 = vpop.f32.mrf.mxu0
      %v717 = vadd.f32 0.0, %v716
      %718 = vdwg.mxu0
      %719 = vrot.lane.b32.xlu0 %v662, 110
      %v720 = vpop.permute.xlu0 %719
      %721 = vrot.lane.b32.xlu0 %v688, 110
      %v722 = vpop.permute.xlu0 %721
      %723 = vrot.lane.b32.xlu0 %v714, 110
      %v724 = vpop.permute.xlu0 %723
      %v725 = vsel %vm379, %v722, %v724
      %v726 = vsel %vm379, %v720, %v722
      %v727 = vsel %vm379, %v724, %v720
      %v728 = vadd.f32 %v659, %v726
      %v729 = vadd.f32 %v685, %v725
      %v730 = vadd.f32 %v711, %v727
      %731 = vrot.lane.b32.xlu0 %v665, 92
      %v732 = vpop.permute.xlu0 %731
      %733 = vrot.lane.b32.xlu0 %v691, 92
      %v734 = vpop.permute.xlu0 %733
      %735 = vrot.lane.b32.xlu0 %v717, 92
      %v736 = vpop.permute.xlu0 %735
      %v737 = vsel %vm392, %v734, %v736
      %v738 = vsel %vm392, %v732, %v734
      %v739 = vsel %vm392, %v736, %v732
      %v740 = vadd.f32 %v728, %v738
      %v741 = vadd.f32 %v729, %v737
      %v742 = vadd.f32 %v730, %v739
      %v743 = vmul.f32 %v740, %v254
      %v744 = vmul.f32 %v741, %v255
      %v745 = vmul.f32 %v742, %v256
      %v746 = vld [vmem:[#allocation3] sm:$0xff]
      %v747 = vld [vmem:[#allocation3 + $0x8] sm:$0xff]
      %v748 = vld [vmem:[#allocation3 + $0x10] sm:$0xff]
      %v749 = vadd.f32 %v743, %v746
      %v750 = vadd.f32 %v744, %v747
      %v751 = vadd.f32 %v745, %v748
      %755 = vrot.lane.b32.xlu0 %v749, 19
      %v756 = vpop.permute.xlu0 %755
      %757 = vrot.lane.b32.xlu0 %v750, 19
      %v758 = vpop.permute.xlu0 %757
      %759 = vrot.lane.b32.xlu0 %v751, 19
      %v760 = vpop.permute.xlu0 %759
      %v761 = vsel %vm436, %v756, %v758
      %v762 = vsel %vm436, %v758, %v760
      %766 = vst.msk [vmem:[#allocation2] sm:$0xff] %vm442, %v756
      %767 = vst [vmem:[#allocation2 + $0x8] sm:$0xff] %v761
      %768 = vst.msk [vmem:[#allocation2 + $0x10] sm:$0xff] %vm445, %v762
      %769 = vst [vmem:[%s251] sm:$0xff] %v749
      %770 = vst [vmem:[%s251 + $0x8] sm:$0xff] %v750
      %771 = vst.msk [vmem:[%s251 + $0x10] sm:$0xff] %vm425, %v751
      %p772 = scmp.lt.s32.totalorder %s17, 1
      %s773 = scalar_select %p772, %s17, 1
      %s774 = smul.addr %s773, 3
      %s775 = smul.addr %s774, 8
      %s776 = scalar_lea.vmem %s6, %s775
      // Predicated region
      $region45: #{recurrent_conv2d_forward.1} parent=43 // pred_check
        %p777 = pneg %p166
      $region46: #{recurrent_conv2d_forward.1} parent=43 // pred_check_branch
        %779 = sbr.rel (%p777) target = $region48
      $region47: #{recurrent_conv2d_forward.1} parent=43 // pred_region
        _
      $region48: #{recurrent_conv2d_forward.1} parent=43 // pred_fallthru
        _
    $region44: #{recurrent_conv2d_forward.1} parent=5 // pred_fallthru
      _
    %p780 = scmp.le.s32.totalorder 2, %s12
    // Predicated region
    $region49: #{recurrent_conv2d_forward.1} parent=5 // pred_check
      %p781 = pneg %p780
    $region50: #{recurrent_conv2d_forward.1} parent=5 // pred_check_branch
      %783 = sbr.rel (%p781) target = $region52
    $region51: #{recurrent_conv2d_forward.1} parent=5 // pred_region
      %s784 = ssub.s32 %s12, 2
      // Predicated region
      $region53: #{recurrent_conv2d_forward.1} parent=51 // pred_check
        %p785 = pneg %p172
      $region54: #{recurrent_conv2d_forward.1} parent=51 // pred_check_branch
        %787 = sbr.rel (%p785) target = $region56
      $region55: #{recurrent_conv2d_forward.1} parent=51 // pred_region
        %p788 = scmp.lt.s32.totalorder %s18, 1
        %s789 = scalar_select %p788, %s18, 1
        %s790 = smul.addr %s789, 3
        %s791 = smul.addr %s790, 8
        %s792 = scalar_lea.vmem %s6, %s791
      $region56: #{recurrent_conv2d_forward.1} parent=51 // pred_fallthru
        _
    $region52: #{recurrent_conv2d_forward.1} parent=5 // pred_fallthru
      _
  $region6: #{recurrent_conv2d_forward.1} parent=0 // loop_footer
    %s16 = sadd.s32 1, %s12
  $region7: #{recurrent_conv2d_forward.1} parent=0 // loop_footer_branch
    %11 = sbr.rel target = $region3
  $region8: #{recurrent_conv2d_forward.1} parent=0 // loop_exit
    _

</llo_original>
